<compile_context>
chip_gen: v6e
topology: v6e:2x2x1
jax: 0.10.0
libtpu: 0.0.40
codegen_flags: <defaults>
</compile_context>

<pallas_src>
import numpy as np
import jax
import jax.numpy as jnp
from jax import lax
from jax.experimental import pallas as pl
from jax.experimental.pallas import tpu as pltpu


# ----------------------------- Pallas kernel -------------------------------

def mi_teacher_kernel(x_ref, w_all_ref, shift_ref, wfc_ref, bfc_ref, out_ref):
    # x_ref:     (TB, 128) bf16  flattened input (cin*36+h*6+w), cols 108..127 zero
    # w_all_ref: (128, 128) bf16 im2col-folded, BN-scaled conv weight
    #                            (lane = e*32 + p*8 + c)
    # shift_ref: (1, 128)  f32   per-channel BN shift (incl. conv bias), tiled
    # wfc_ref:   (128, 10) bf16  FC weight on pooled lanes 0..31; rows 32..127 zero
    # bfc_ref:   (1, 10)   f32
    # out_ref:   (TB, 10)  f32
    y = jnp.dot(x_ref[...], w_all_ref[...],
                preferred_element_type=jnp.float32)          # (TB, 128)

    # 2x2 max-pool over the e-groups (lane strides of 32) via XLU rotations.
    m = jnp.maximum(y, pltpu.roll(y, shift=64, axis=1))
    m = jnp.maximum(m, pltpu.roll(m, shift=32, axis=1))

    # Fused BN shift + ReLU (monotone, so pooling first is equivalent).
    pooled = jnp.maximum(m + shift_ref[...], 0.0)            # lanes 0..31 valid

    # Linear(32 -> 10); dead lanes hit zero weight rows and contribute nothing.
    out_ref[...] = (
        jnp.dot(pooled.astype(jnp.bfloat16), wfc_ref[...],
                preferred_element_type=jnp.float32)
        + bfc_ref[...])


# ------------------------------ wrapper -------------------------------------

def mi_teacher_forward(x, params, tb=4096):
    """x: (B, 3, 6, 6) float32 NCHW. Returns logits (B, 10) float32."""
    B = x.shape[0]
    eps = 1e-5

    # Fold BatchNorm (inference mode) into conv weight / a per-channel shift.
    scale = params["bn_gamma"] / jnp.sqrt(params["bn_var"] + eps)        # (8,)
    wc = params["conv_w"].reshape(8, 27) * scale[:, None]                # (8, 27)
    shift_c = (scale * (params["conv_b"] - params["bn_mean"])
               + params["bn_beta"])                                      # (8,)

    # Fold the im2col gather into the conv weight: W_all[row, lane] with
    # row = cin*36 + (2*ph+dh+kh)*6 + (2*pw+dw+kw), lane = e*32 + p*8 + c.
    rows = np.zeros((128, 27), dtype=np.int32)
    for e in range(4):
        dh, dw = e // 2, e % 2
        for p in range(4):
            ph, pw = p // 2, p % 2
            for c in range(8):
                lane = e * 32 + p * 8 + c
                for cin in range(3):
                    for kh in range(3):
                        for kw in range(3):
                            k = cin * 9 + kh * 3 + kw
                            rows[lane, k] = (cin * 36
                                             + (2 * ph + dh + kh) * 6
                                             + (2 * pw + dw + kw))
    lanes = np.broadcast_to(np.arange(128, dtype=np.int32)[:, None], (128, 27))
    wc_per_lane = wc[jnp.asarray(np.arange(128) % 8)]                    # (128, 27)
    w_all = (jnp.zeros((128, 128), jnp.float32)
             .at[jnp.asarray(rows), jnp.asarray(lanes)].set(wc_per_lane)
             .astype(jnp.bfloat16))                                      # (128, 128)

    shift = jnp.tile(shift_c, 16)[None, :].astype(jnp.float32)           # (1, 128)

    # FC weight: PyTorch flatten order is j = c*4 + p; pooled lanes are p*8 + c.
    perm = np.zeros(32, dtype=np.int32)
    for p in range(4):
        for c in range(8):
            perm[p * 8 + c] = c * 4 + p
    wfc = (jnp.zeros((128, 10), jnp.float32)
           .at[jnp.arange(32)].set(params["fc_w"].T[jnp.asarray(perm)])
           .astype(jnp.bfloat16))                                        # (128, 10)
    bfc = params["fc_b"][None, :].astype(jnp.float32)                    # (1, 10)

    # Batch tiling: round to 32 (bf16 (16,128) tile friendly), pad only the
    # small raw input.
    b_al = -(-B // 32) * 32
    tb = max(32, (min(tb, b_al) // 32) * 32)
    if b_al // tb == 1 and b_al >= 64:
        tb = -(-(b_al // 2) // 32) * 32     # >= 2 grid steps for v7x's 2nd TC
    b_pad = -(-b_al // tb) * tb

    x_flat = x.reshape(B, 108)
    x_flat = jnp.pad(x_flat, ((0, b_pad - B), (0, 128 - 108)))
    x_flat = x_flat.astype(jnp.bfloat16)                                 # (b_pad, 128)

    out = pl.pallas_call(
        mi_teacher_kernel,
        out_shape=jax.ShapeDtypeStruct((b_pad, 10), jnp.float32),
        grid=(b_pad // tb,),
        in_specs=[
            pl.BlockSpec((tb, 128), lambda i: (i, 0)),      # x
            pl.BlockSpec((128, 128), lambda i: (0, 0)),     # folded conv weight
            pl.BlockSpec((1, 128), lambda i: (0, 0)),       # bn shift
            pl.BlockSpec((128, 10), lambda i: (0, 0)),      # fc weight
            pl.BlockSpec((1, 10), lambda i: (0, 0)),        # fc bias
        ],
        out_specs=pl.BlockSpec((tb, 10), lambda i: (i, 0)),
        compiler_params=pltpu.CompilerParams(
            dimension_semantics=("parallel",)),
    )(x_flat, w_all, shift, wfc, bfc)
    return out[:B]


# ------------------------------ JAX glue ------------------------------------

def _make_params(key, num_classes=10):
    ks = jax.random.split(key, 6)
    return {
        "conv_w": 0.1 * jax.random.normal(ks[0], (8, 3, 3, 3), jnp.float32),
        "conv_b": 0.1 * jax.random.normal(ks[1], (8,), jnp.float32),
        "bn_gamma": 1.0 + 0.1 * jax.random.normal(ks[2], (8,), jnp.float32),
        "bn_beta": 0.1 * jax.random.normal(ks[3], (8,), jnp.float32),
        "bn_mean": jnp.zeros((8,), jnp.float32),
        "bn_var": jnp.ones((8,), jnp.float32),
        "fc_w": 0.1 * jax.random.normal(ks[4], (num_classes, 32), jnp.float32),
        "fc_b": 0.1 * jax.random.normal(ks[5], (num_classes,), jnp.float32),
    }


def _reference_forward(x, p, eps=1e-5):
    """Pure-JAX f32 reference replicating the PyTorch forward (eval-mode BN)."""
    conv = lax.conv_general_dilated(
        x, p["conv_w"], window_strides=(1, 1), padding="VALID",
        dimension_numbers=("NCHW", "OIHW", "NCHW"))
    conv = conv + p["conv_b"][None, :, None, None]
    bn = (p["bn_gamma"][None, :, None, None]
          * (conv - p["bn_mean"][None, :, None, None])
          / jnp.sqrt(p["bn_var"][None, :, None, None] + eps)
          + p["bn_beta"][None, :, None, None])
    act = jnp.maximum(bn, 0.0)                               # (B, 8, 4, 4)
    B = act.shape[0]
    pooled = act.reshape(B, 8, 2, 2, 2, 2).max(axis=(3, 5))  # (B, 8, 2, 2)
    flat = pooled.reshape(B, -1)                             # (B, 32) NCHW flatten
    return flat @ p["fc_w"].T + p["fc_b"][None, :]


# ------------------------------- main ----------------------------------------

if __name__ == "__main__":
    key = jax.random.PRNGKey(0)
    kx, kp = jax.random.split(key)

    # Input spatial size 6 -> conv(3x3, valid) -> 4 -> maxpool(2) -> 2,
    # so flatten gives 8*2*2 = 32 = fc1.in_features (8*4).
    x = jax.random.normal(kx, (2, 3, 6, 6), jnp.float32)
    params = _make_params(kp, num_classes=10)

    out = jax.block_until_ready(mi_teacher_forward(x, params))

    ref = _reference_forward(x, params)
    # Inputs / weights stream as bf16 (f32 MXU accumulation), so compare
    # against the f32 reference with a relaxed tolerance.
    np.testing.assert_allclose(np.asarray(out), np.asarray(ref),
                               rtol=2e-2, atol=2e-2)
    print("KERNEL_OK")
</pallas_src>

<mosaic_0001>
module attributes {stable_mosaic.version = 11 : i64} {
  func.func @mi_teacher_kernel(%arg0: i32, %arg1: memref<32x128xbf16, #tpu.memory_space<vmem>>, %arg2: memref<128x128xbf16, #tpu.memory_space<vmem>>, %arg3: memref<1x128xf32, #tpu.memory_space<vmem>>, %arg4: memref<128x10xbf16, #tpu.memory_space<vmem>>, %arg5: memref<1x10xf32, #tpu.memory_space<vmem>>, %arg6: memref<32x10xf32, #tpu.memory_space<vmem>>) attributes {dimension_semantics = [#tpu.dimension_semantics<parallel>], iteration_bounds = array<i64: 1>, scalar_prefetch = 0 : i64, scratch_operands = 0 : i64, tpu.core_type = #tpu.core_type<tc>, window_params = [{transform_indices = @transform_0, window_bounds = array<i64: 32, 128>}, {pipeline_mode = #tpu.pipeline_mode<synchronous>, transform_indices = @transform_1, window_bounds = array<i64: 128, 128>}, {pipeline_mode = #tpu.pipeline_mode<synchronous>, transform_indices = @transform_2, window_bounds = array<i64: 1, 128>}, {pipeline_mode = #tpu.pipeline_mode<synchronous>, transform_indices = @transform_3, window_bounds = array<i64: 128, 10>}, {pipeline_mode = #tpu.pipeline_mode<synchronous>, transform_indices = @transform_4, window_bounds = array<i64: 1, 10>}, {transform_indices = @transform_5, window_bounds = array<i64: 32, 10>}]} {
    %c0 = arith.constant 0 : index
    %c0_0 = arith.constant 0 : index
    %0 = vector.load %arg1[%c0, %c0_0] : memref<32x128xbf16, #tpu.memory_space<vmem>>, vector<32x128xbf16>
    %c0_1 = arith.constant 0 : index
    %c0_2 = arith.constant 0 : index
    %1 = vector.load %arg2[%c0_1, %c0_2] : memref<128x128xbf16, #tpu.memory_space<vmem>>, vector<128x128xbf16>
    %cst = arith.constant dense<0.000000e+00> : vector<32x128xf32>
    %2 = tpu.matmul %0, %1, %cst {dimension_numbers = #tpu.dot_dimension_numbers<[1], [0], [0], [1], [0, 0, 1, 1], [], []>} : vector<32x128xbf16>, vector<128x128xbf16>, vector<32x128xf32> -> vector<32x128xf32>
    %c64_i32 = arith.constant 64 : i32
    %3 = tpu.dynamic_rotate %2 by %c64_i32 dim 1 : vector<32x128xf32>, i32 -> vector<32x128xf32>
    %4 = arith.maximumf %2, %3 : vector<32x128xf32>
    %c32_i32 = arith.constant 32 : i32
    %5 = tpu.dynamic_rotate %4 by %c32_i32 dim 1 : vector<32x128xf32>, i32 -> vector<32x128xf32>
    %6 = arith.maximumf %4, %5 : vector<32x128xf32>
    %c0_3 = arith.constant 0 : index
    %c0_4 = arith.constant 0 : index
    %7 = vector.load %arg3[%c0_3, %c0_4] : memref<1x128xf32, #tpu.memory_space<vmem>>, vector<1x128xf32>
    %8 = vector.broadcast %7 : vector<1x128xf32> to vector<32x128xf32>
    %9 = arith.addf %6, %8 : vector<32x128xf32>
    %cst_5 = arith.constant 0.000000e+00 : f32
    %10 = vector.broadcast %cst_5 : f32 to vector<32x128xf32>
    %11 = arith.maximumf %9, %10 : vector<32x128xf32>
    %12 = arith.truncf %11 : vector<32x128xf32> to vector<32x128xbf16>
    %c0_6 = arith.constant 0 : index
    %c0_7 = arith.constant 0 : index
    %13 = vector.load %arg4[%c0_6, %c0_7] : memref<128x10xbf16, #tpu.memory_space<vmem>>, vector<128x10xbf16>
    %cst_8 = arith.constant dense<0.000000e+00> : vector<32x10xf32>
    %14 = tpu.matmul %12, %13, %cst_8 {dimension_numbers = #tpu.dot_dimension_numbers<[1], [0], [0], [1], [0, 0, 1, 1], [], []>} : vector<32x128xbf16>, vector<128x10xbf16>, vector<32x10xf32> -> vector<32x10xf32>
    %c0_9 = arith.constant 0 : index
    %c0_10 = arith.constant 0 : index
    %15 = vector.load %arg5[%c0_9, %c0_10] : memref<1x10xf32, #tpu.memory_space<vmem>>, vector<1x10xf32>
    %16 = vector.broadcast %15 : vector<1x10xf32> to vector<32x10xf32>
    %17 = arith.addf %14, %16 : vector<32x10xf32>
    %c0_11 = arith.constant 0 : index
    %c0_12 = arith.constant 0 : index
    %18 = vector.load %arg6[%c0_11, %c0_12] : memref<32x10xf32, #tpu.memory_space<vmem>>, vector<32x10xf32>
    tpu.vector_store %arg6[%c0_11, %c0_12], %17 {strides = array<i32>} : memref<32x10xf32, #tpu.memory_space<vmem>>, vector<32x10xf32>,
    return
  }
  func.func @transform_0(%arg0: i32) -> (i32, i32) {
    %c0_i32 = arith.constant 0 : i32
    %c0_i32_0 = arith.constant 0 : i32
    return %arg0, %c0_i32 : i32, i32
  }
  func.func @transform_1(%arg0: i32) -> (i32, i32) {
    %c0_i32 = arith.constant 0 : i32
    %c0_i32_0 = arith.constant 0 : i32
    %c0_i32_1 = arith.constant 0 : i32
    return %c0_i32, %c0_i32_0 : i32, i32
  }
  func.func @transform_2(%arg0: i32) -> (i32, i32) {
    %c0_i32 = arith.constant 0 : i32
    %c0_i32_0 = arith.constant 0 : i32
    %c0_i32_1 = arith.constant 0 : i32
    return %c0_i32, %c0_i32_0 : i32, i32
  }
  func.func @transform_3(%arg0: i32) -> (i32, i32) {
    %c0_i32 = arith.constant 0 : i32
    %c0_i32_0 = arith.constant 0 : i32
    %c0_i32_1 = arith.constant 0 : i32
    return %c0_i32, %c0_i32_0 : i32, i32
  }
  func.func @transform_4(%arg0: i32) -> (i32, i32) {
    %c0_i32 = arith.constant 0 : i32
    %c0_i32_0 = arith.constant 0 : i32
    %c0_i32_1 = arith.constant 0 : i32
    return %c0_i32, %c0_i32_0 : i32, i32
  }
  func.func @transform_5(%arg0: i32) -> (i32, i32) {
    %c0_i32 = arith.constant 0 : i32
    %c0_i32_0 = arith.constant 0 : i32
    return %arg0, %c0_i32 : i32, i32
  }
}

</mosaic_0001>

<llo_original>
// kernel: tpu_custom_call.1
$region0: #{tpu_custom_call.1}
  #allocation0 [shape = 'u32[]', space=smem, size = 0x4, offset = 0x4, fixed_abs, tag = 'smem constant byte address 0x4 - core index']
  #allocation1 [shape = 'u32[144,128]{1,0:T(1,128)}', space=vmem, size = 0x12000, scoped, tag = 'internal scratch']
  %s0 = inlined_call_operand.hbm [shape: bf16[32,128], index: 0, kind: input, shape index: {}]
  %s1 = inlined_call_operand.vmem [shape: bf16[128,128], index: 1, kind: input, shape index: {}]
  %s2 = inlined_call_operand.vmem [shape: f32[1,128], index: 2, kind: input, shape index: {}]
  %s3 = inlined_call_operand.vmem [shape: bf16[128,10], index: 3, kind: input, shape index: {}]
  %s4 = inlined_call_operand.vmem [shape: f32[1,10], index: 4, kind: input, shape index: {}]
  %s5 = inlined_call_operand.vmem [shape: f32[32,10], index: 5, kind: output, shape index: {}]
  %s6 = sld [smem:[#allocation0]]
  $region34: #{tpu_custom_call.1} parent=0
    _
  %s8 = ssub.s32 1, %s6
  %s9 = scalar_select 0, %s8, %s6
  $region1: #{tpu_custom_call.1} parent=0
    #allocation2 [shape = 'u8[8192]{0}', space=vmem, size = 0x2000, scoped, tag = 'input window, operand 0, single buffered']
    #allocation3 [shape = 's32[1]{0}', space=sflag, size = 0x4, scoped, tag = 'scoped memory for tpu_custom_call.1']
    %10 = vsyncpa [#allocation3], 0
    // Predicated region
    $region2: #{tpu_custom_call.1} parent=1 // pred_check
      _
    $region3: #{tpu_custom_call.1} parent=1 // pred_check_branch
      %12 = sbr.rel (0) target = $region5
    $region4: #{tpu_custom_call.1} parent=1 // pred_region
      %s14 = ssub.s32 256, 256
      %15 = vsyncadd [#allocation3], %s14
      %s16 = sshll.u32 [#allocation2], 4
      %s17 = int_to_ptr.vmem [resolvable:$true] %s16
      %22 = dma.hbm_to_vmem [thread:$0]  %s0, 256, %s17, [#allocation3], 64, 64, 4
    $region5: #{tpu_custom_call.1} parent=1 // pred_fallthru
      _
    // Predicated region
    $region6: #{tpu_custom_call.1} parent=1 // pred_check
      _
    $region7: #{tpu_custom_call.1} parent=1 // pred_check_branch
      %24 = sbr.rel (0) target = $region9
    $region8: #{tpu_custom_call.1} parent=1 // pred_region
      _
    $region9: #{tpu_custom_call.1} parent=1 // pred_fallthru
      _
    // Predicated region
    $region10: #{tpu_custom_call.1} parent=1 // pred_check
      _
    $region11: #{tpu_custom_call.1} parent=1 // pred_check_branch
      %26 = sbr.rel (0) target = $region13
    $region12: #{tpu_custom_call.1} parent=1 // pred_region
      _
    $region13: #{tpu_custom_call.1} parent=1 // pred_fallthru
      _
    // Predicated region
    $region14: #{tpu_custom_call.1} parent=1 // pred_check
      _
    $region15: #{tpu_custom_call.1} parent=1 // pred_check_branch
      %28 = sbr.rel (0) target = $region17
    $region16: #{tpu_custom_call.1} parent=1 // pred_region
      _
    $region17: #{tpu_custom_call.1} parent=1 // pred_fallthru
      _
    // Predicated region
    $region18: #{tpu_custom_call.1} parent=1 // pred_check
      _
    $region19: #{tpu_custom_call.1} parent=1 // pred_check_branch
      %30 = sbr.rel (0) target = $region21
    $region20: #{tpu_custom_call.1} parent=1 // pred_region
      _
    $region21: #{tpu_custom_call.1} parent=1 // pred_fallthru
      _
    // Predicated region
    $region22: #{tpu_custom_call.1} parent=1 // pred_check
      _
    $region23: #{tpu_custom_call.1} parent=1 // pred_check_branch
      %32 = sbr.rel (0) target = $region25
    $region24: #{tpu_custom_call.1} parent=1 // pred_region
      %33 = dma.done [#allocation3], 256
    $region25: #{tpu_custom_call.1} parent=1 // pred_fallthru
      _
    %v35 = vld [vmem:[#allocation2] sm:$0xf]
    %v36 = vld [vmem:[#allocation2 + $0x4] sm:$0xf]
    %v37 = vld [vmem:[#allocation2 + $0x8] sm:$0xf]
    %v38 = vld [vmem:[#allocation2 + $0xc] sm:$0xf]
    %v39 = vld [vmem:[%s1] sm:$0xf]
    %v40 = vld [vmem:[%s1 + $0x4] sm:$0xf]
    %v41 = vld [vmem:[%s1 + $0x8] sm:$0xf]
    %v42 = vld [vmem:[%s1 + $0xc] sm:$0xf]
    %v43 = vld [vmem:[%s1 + $0x10] sm:$0xf]
    %v44 = vld [vmem:[%s1 + $0x14] sm:$0xf]
    %v45 = vld [vmem:[%s1 + $0x18] sm:$0xf]
    %v46 = vld [vmem:[%s1 + $0x1c] sm:$0xf]
    %v47 = vld [vmem:[%s1 + $0x20] sm:$0xf]
    %v48 = vld [vmem:[%s1 + $0x24] sm:$0xf]
    %v49 = vld [vmem:[%s1 + $0x28] sm:$0xf]
    %v50 = vld [vmem:[%s1 + $0x2c] sm:$0xf]
    %v51 = vld [vmem:[%s1 + $0x30] sm:$0xf]
    %v52 = vld [vmem:[%s1 + $0x34] sm:$0xf]
    %v53 = vld [vmem:[%s1 + $0x38] sm:$0xf]
    %v54 = vld [vmem:[%s1 + $0x3c] sm:$0xf]
    %v59 = vunpack.c.l.b16 %v35
    %v60 = vunpack.c.l.b16 %v36
    %v61 = vunpack.c.l.b16 %v37
    %v62 = vunpack.c.l.b16 %v38
    %v63 = vpack.c.b16 %v60, %v59
    %v64 = vpack.c.b16 %v62, %v61
    %v83 = vunpack.c.l.b16 %v39
    %v84 = vunpack.c.l.b16 %v40
    %v85 = vunpack.c.l.b16 %v41
    %v86 = vunpack.c.l.b16 %v42
    %v87 = vunpack.c.l.b16 %v43
    %v88 = vunpack.c.l.b16 %v44
    %v89 = vunpack.c.l.b16 %v45
    %v90 = vunpack.c.l.b16 %v46
    %v91 = vunpack.c.l.b16 %v47
    %v92 = vunpack.c.l.b16 %v48
    %v93 = vunpack.c.l.b16 %v49
    %v94 = vunpack.c.l.b16 %v50
    %v95 = vunpack.c.l.b16 %v51
    %v96 = vunpack.c.l.b16 %v52
    %v97 = vunpack.c.l.b16 %v53
    %v98 = vunpack.c.l.b16 %v54
    %v99 = vpack.c.b16 %v84, %v83
    %v100 = vpack.c.b16 %v86, %v85
    %v101 = vpack.c.b16 %v88, %v87
    %v102 = vpack.c.b16 %v90, %v89
    %v103 = vpack.c.b16 %v92, %v91
    %v104 = vpack.c.b16 %v94, %v93
    %v105 = vpack.c.b16 %v96, %v95
    %v106 = vpack.c.b16 %v98, %v97
    %115 = vmatprep.subr.bf16.mxu0 0
    %116 = vmatpush1.bf16.msra.mxu0 %v106
    %117 = vmatprep.subr.bf16.mxu0 0
    %118 = vmatpush1.bf16.msra.mxu0 %v105
    %119 = vmatprep.subr.bf16.mxu0 0
    %120 = vmatpush1.bf16.msra.mxu0 %v104
    %121 = vmatprep.subr.bf16.mxu0 0
    %122 = vmatpush1.bf16.msra.mxu0 %v103
    %123 = vmatprep.subr.bf16.mxu0 0
    %124 = vmatpush1.bf16.msra.mxu0 %v102
    %125 = vmatprep.subr.bf16.mxu0 0
    %126 = vmatpush1.bf16.msra.mxu0 %v101
    %127 = vmatprep.subr.bf16.mxu0 0
    %128 = vmatpush1.bf16.msra.mxu0 %v100
    %129 = vmatprep.subr.bf16.mxu0 0
    %130 = vmatpush1.bf16.msra.mxu0 %v99
    %131 = vmatprep.subr.bf16.mxu0 0
    %132 = vmatpush2.bf16.msra.mxu0 0
    %133 = vmatprep.subr.bf16.mxu0 0
    %134 = vmatpush2.bf16.msra.mxu0 0
    %135 = vmatprep.subr.bf16.mxu0 0
    %136 = vmatpush2.bf16.msra.mxu0 0
    %137 = vmatprep.subr.bf16.mxu0 0
    %138 = vmatpush2.bf16.msra.mxu0 0
    %139 = vmatprep.subr.bf16.mxu0 0
    %140 = vmatpush2.bf16.msra.mxu0 0
    %141 = vmatprep.subr.bf16.mxu0 0
    %142 = vmatpush2.bf16.msra.mxu0 0
    %143 = vmatprep.subr.bf16.mxu0 0
    %144 = vmatpush2.bf16.msra.mxu0 0
    %145 = vmatprep.subr.bf16.mxu0 0
    %146 = vmatpush2.bf16.msra.mxu0 0
    %147 = vmatprep.mubr.bf16.mxu0 0
    %148 = vmatmul.mubr.bf16.gmra.mxu0 %v63
    %v149 = vpop.f32.mrf.mxu0
    %v150 = vadd.f32 0.0, %v149
    %v151 = vpop.f32.mrf.mxu0
    %v152 = vpop.f32.mrf.mxu0
    %v153 = vadd.f32 0.0, %v152
    %v154 = vpop.f32.mrf.mxu0
    %155 = vmatprep.mubr.bf16.mxu0 0
    %156 = vmatmul.mubr.bf16.gmra.mxu0 %v64
    %v157 = vpop.f32.mrf.mxu0
    %v158 = vadd.f32 0.0, %v157
    %v159 = vpop.f32.mrf.mxu0
    %v160 = vpop.f32.mrf.mxu0
    %v161 = vadd.f32 0.0, %v160
    %v162 = vpop.f32.mrf.mxu0
    %163 = vdwg.mxu0
    %164 = vrot.lane.b32.xlu0 %v150, 64
    %v165 = vpop.permute.xlu0 %164
    %166 = vrot.lane.b32.xlu0 %v153, 64
    %v167 = vpop.permute.xlu0 %166
    %168 = vrot.lane.b32.xlu0 %v158, 64
    %v169 = vpop.permute.xlu0 %168
    %170 = vrot.lane.b32.xlu0 %v161, 64
    %v171 = vpop.permute.xlu0 %170
    %v172 = vmax.f32 %v150, %v165
    %v173 = vmax.f32 %v153, %v167
    %v174 = vmax.f32 %v158, %v169
    %v175 = vmax.f32 %v161, %v171
    %176 = vrot.lane.b32.xlu0 %v172, 32
    %v177 = vpop.permute.xlu0 %176
    %178 = vrot.lane.b32.xlu0 %v173, 32
    %v179 = vpop.permute.xlu0 %178
    %180 = vrot.lane.b32.xlu0 %v174, 32
    %v181 = vpop.permute.xlu0 %180
    %182 = vrot.lane.b32.xlu0 %v175, 32
    %v183 = vpop.permute.xlu0 %182
    %v184 = vmax.f32 %v172, %v177
    %v185 = vmax.f32 %v173, %v179
    %v186 = vmax.f32 %v174, %v181
    %v187 = vmax.f32 %v175, %v183
    %v188 = vld [vmem:[%s2] sm:$0x1]
    %v190 = vlaneseq
    %v191 = vshrl.u32 %v190, 7
    %v192 = vsub.s32 0, %v191
    %v193 = vrot.slane %v188, %v192
    %v195 = vadd.f32 %v184, %v193
    %v196 = vadd.f32 %v185, %v193
    %v197 = vadd.f32 %v186, %v193
    %v198 = vadd.f32 %v187, %v193
    %v199 = vmax.f32 %v195, 0.0
    %v200 = vmax.f32 %v196, 0.0
    %v201 = vmax.f32 %v197, 0.0
    %v202 = vmax.f32 %v198, 0.0
    %v203 = vpack.c.bf16 %v200, %v199
    %v204 = vpack.c.bf16 %v202, %v201
    %v205 = vld [vmem:[%s3] sm:$0xf]
    %v206 = vld [vmem:[%s3 + $0x4] sm:$0xf]
    %v207 = vld [vmem:[%s3 + $0x8] sm:$0xf]
    %v208 = vld [vmem:[%s3 + $0xc] sm:$0xf]
    %v209 = vld [vmem:[%s3 + $0x10] sm:$0xf]
    %v210 = vld [vmem:[%s3 + $0x14] sm:$0xf]
    %v211 = vld [vmem:[%s3 + $0x18] sm:$0xf]
    %v212 = vld [vmem:[%s3 + $0x1c] sm:$0xf]
    %v213 = vld [vmem:[%s3 + $0x20] sm:$0xf]
    %v214 = vld [vmem:[%s3 + $0x24] sm:$0xf]
    %v215 = vld [vmem:[%s3 + $0x28] sm:$0xf]
    %v216 = vld [vmem:[%s3 + $0x2c] sm:$0xf]
    %v217 = vld [vmem:[%s3 + $0x30] sm:$0xf]
    %v218 = vld [vmem:[%s3 + $0x34] sm:$0xf]
    %v219 = vld [vmem:[%s3 + $0x38] sm:$0xf]
    %v220 = vld [vmem:[%s3 + $0x3c] sm:$0xf]
    %v221 = vld [vmem:[%s4] sm:$0x1]
    %v223 = vlaneseq
    %v224 = vshrl.u32 %v223, 7
    %v225 = vsub.s32 0, %v224
    %v226 = vrot.slane %v221, %v225
    %v244 = vunpack.c.l.b16 %v205
    %v245 = vunpack.c.l.b16 %v206
    %v246 = vunpack.c.l.b16 %v207
    %v247 = vunpack.c.l.b16 %v208
    %v248 = vunpack.c.l.b16 %v209
    %v249 = vunpack.c.l.b16 %v210
    %v250 = vunpack.c.l.b16 %v211
    %v251 = vunpack.c.l.b16 %v212
    %v252 = vunpack.c.l.b16 %v213
    %v253 = vunpack.c.l.b16 %v214
    %v254 = vunpack.c.l.b16 %v215
    %v255 = vunpack.c.l.b16 %v216
    %v256 = vunpack.c.l.b16 %v217
    %v257 = vunpack.c.l.b16 %v218
    %v258 = vunpack.c.l.b16 %v219
    %v259 = vunpack.c.l.b16 %v220
    %v260 = vpack.c.b16 %v245, %v244
    %v261 = vpack.c.b16 %v247, %v246
    %v262 = vpack.c.b16 %v249, %v248
    %v263 = vpack.c.b16 %v251, %v250
    %v264 = vpack.c.b16 %v253, %v252
    %v265 = vpack.c.b16 %v255, %v254
    %v266 = vpack.c.b16 %v257, %v256
    %v267 = vpack.c.b16 %v259, %v258
    %276 = vmatprep.subr.bf16.mxu0 0
    %277 = vmatpush1.bf16.msra.mxu0 %v267
    %278 = vmatprep.subr.bf16.mxu0 0
    %279 = vmatpush1.bf16.msra.mxu0 %v266
    %280 = vmatprep.subr.bf16.mxu0 0
    %281 = vmatpush1.bf16.msra.mxu0 %v265
    %282 = vmatprep.subr.bf16.mxu0 0
    %283 = vmatpush1.bf16.msra.mxu0 %v264
    %284 = vmatprep.subr.bf16.mxu0 0
    %285 = vmatpush1.bf16.msra.mxu0 %v263
    %286 = vmatprep.subr.bf16.mxu0 0
    %287 = vmatpush1.bf16.msra.mxu0 %v262
    %288 = vmatprep.subr.bf16.mxu0 0
    %289 = vmatpush1.bf16.msra.mxu0 %v261
    %290 = vmatprep.subr.bf16.mxu0 0
    %291 = vmatpush1.bf16.msra.mxu0 %v260
    %292 = vmatprep.subr.bf16.mxu0 0
    %293 = vmatpush2.bf16.msra.mxu0 0
    %294 = vmatprep.subr.bf16.mxu0 0
    %295 = vmatpush2.bf16.msra.mxu0 0
    %296 = vmatprep.subr.bf16.mxu0 0
    %297 = vmatpush2.bf16.msra.mxu0 0
    %298 = vmatprep.subr.bf16.mxu0 0
    %299 = vmatpush2.bf16.msra.mxu0 0
    %300 = vmatprep.subr.bf16.mxu0 0
    %301 = vmatpush2.bf16.msra.mxu0 0
    %302 = vmatprep.subr.bf16.mxu0 0
    %303 = vmatpush2.bf16.msra.mxu0 0
    %304 = vmatprep.subr.bf16.mxu0 0
    %305 = vmatpush2.bf16.msra.mxu0 0
    %306 = vmatprep.subr.bf16.mxu0 0
    %307 = vmatpush2.bf16.msra.mxu0 0
    %308 = vmatprep.mubr.bf16.mxu0 0
    %309 = vmatmul.mubr.bf16.gmra.mxu0 %v203
    %v310 = vpop.f32.mrf.mxu0
    %v311 = vadd.f32 %v226, %v310
    %v312 = vpop.f32.mrf.mxu0
    %v313 = vpop.f32.mrf.mxu0
    %v314 = vadd.f32 %v226, %v313
    %v315 = vpop.f32.mrf.mxu0
    %316 = vmatprep.mubr.bf16.mxu0 0
    %317 = vmatmul.mubr.bf16.gmra.mxu0 %v204
    %v318 = vpop.f32.mrf.mxu0
    %v319 = vadd.f32 %v226, %v318
    %v320 = vpop.f32.mrf.mxu0
    %v321 = vpop.f32.mrf.mxu0
    %v322 = vadd.f32 %v226, %v321
    %v323 = vpop.f32.mrf.mxu0
    %324 = vdwg.mxu0
    %vm325 = vcmask 80896
    %326 = vst.msk [vmem:[%s5] sm:$0xff] %vm325, %v311
    %327 = vst.msk [vmem:[%s5 + $0x8] sm:$0xff] %vm325, %v314
    %328 = vst.msk [vmem:[%s5 + $0x10] sm:$0xff] %vm325, %v319
    %329 = vst.msk [vmem:[%s5 + $0x18] sm:$0xff] %vm325, %v322
    // Predicated region
    $region26: #{tpu_custom_call.1} parent=1 // pred_check
      _
    $region27: #{tpu_custom_call.1} parent=1 // pred_check_branch
      %331 = sbr.rel (0) target = $region29
    $region28: #{tpu_custom_call.1} parent=1 // pred_region
      _
    $region29: #{tpu_custom_call.1} parent=1 // pred_fallthru
      _
    // Predicated region
    $region30: #{tpu_custom_call.1} parent=1 // pred_check
      _
    $region31: #{tpu_custom_call.1} parent=1 // pred_check_branch
      %333 = sbr.rel (0) target = $region33
    $region32: #{tpu_custom_call.1} parent=1 // pred_region
      _
    $region33: #{tpu_custom_call.1} parent=1 // pred_fallthru
      _
    %334 = vsyncpa [#allocation3], 1

</llo_original>
